<compile_context>
chip_gen: v7x
topology: tpu7x:2x2x1
jax: 0.10.0
libtpu: 0.0.40
codegen_flags: <defaults>
</compile_context>

<pallas_src>
import functools

import numpy as np
import jax
import jax.numpy as jnp
from jax import lax
from jax.experimental import pallas as pl
from jax.experimental.pallas import tpu as pltpu

_MXU_DTYPE = jnp.bfloat16       # MXU operand dtype; accumulation stays f32.
_VMEM_LIMIT = 48 * 1024 * 1024  # safe on all generations (v7x has 64 MiB/TC).


def _round_up(x, m):
    return ((x + m - 1) // m) * m


# --------------------------------------------------------------------------------------
# Fused predictor stack: Conv1d(k=3,p=1) -> ReLU -> Conv1d(k=3,p=1) -> ReLU -> Linear(F,1)
# Several predictors (pitch + energy) share one pallas_call via the leading grid axis.
# --------------------------------------------------------------------------------------
def _predictor_kernel(x_ref, w1_ref, b1_ref, w2_ref, b2_ref, wl_ref, bl_ref,
                      out_ref, xim_ref, h1p_ref, h2im_ref, *, T, K, pad, Bb):
    # x_ref  : (Bb, T+2*pad, C) bf16   zero-padded input block
    # w1_ref : (1, K*C, F) bf16        conv1 weight (im2col layout)
    # w2_ref : (1, K*F, F) bf16        conv2 weight (im2col layout)
    # wl_ref : (1, 1, F)  bf16         final linear weight (row vector)
    # b*_ref : f32 biases
    # out_ref: (1, 1, 1, Bb*T) f32     lane-dense per-frame predictions
    # scratch: xim (Bb*T, K*C) bf16, h1p (Bb, T+2*pad, F) bf16, h2im (Bb*T, K*F) bf16
    C = x_ref.shape[-1]
    F = w1_ref.shape[-1]

    # conv1: stage im2col into VMEM (lane-aligned column writes), one MXU matmul (K*C contraction)
    for b in range(Bb):
        for k in range(K):
            xim_ref[b * T:(b + 1) * T, k * C:(k + 1) * C] = x_ref[b, k:k + T, :]
    h1 = jnp.dot(xim_ref[...], w1_ref[0], preferred_element_type=jnp.float32) + b1_ref[0]
    h1 = jnp.maximum(h1, 0.0)

    # Re-pad ReLU(conv1) per batch element so conv2's "same" padding is plain zero rows.
    # Only the 2*pad padding rows are zeroed (not the whole buffer).
    h1p_ref[:, :pad, :] = jnp.zeros((Bb, pad, F), h1p_ref.dtype)
    h1p_ref[:, pad + T:, :] = jnp.zeros((Bb, pad, F), h1p_ref.dtype)
    for b in range(Bb):
        h1p_ref[b, pad:pad + T, :] = h1[b * T:(b + 1) * T, :].astype(h1p_ref.dtype)

    # conv2: same staged im2col + single MXU matmul
    for b in range(Bb):
        for k in range(K):
            h2im_ref[b * T:(b + 1) * T, k * F:(k + 1) * F] = h1p_ref[b, k:k + T, :]
    h2 = jnp.dot(h2im_ref[...], w2_ref[0], preferred_element_type=jnp.float32) + b2_ref[0]
    h2 = jnp.maximum(h2, 0.0)

    # Linear(F, 1), computed transposed (contract both F axes) -> lane-dense (1, Bb*T) store.
    s = lax.dot_general(wl_ref[0], h2.astype(wl_ref.dtype),
                        (((1,), (1,)), ((), ())),
                        preferred_element_type=jnp.float32)
    out_ref[0, 0] = s + bl_ref[0]


def predictors_forward(x, params_list, *, kernel_size=3):
    """Run len(params_list) predictor stacks over the same x: (B, T, C) -> (P, B, T)."""
    assert kernel_size == 3, "module hardcodes padding=1 ('same' only for kernel_size=3)"
    B, T, C = x.shape
    K, pad = kernel_size, 1
    P = len(params_list)
    F = params_list[0]["w_conv1"].shape[0]
    Tp = T + 2 * pad

    # Fold as many batch elements as sensible into one MXU matmul (M = Bb*T rows).
    Bb = 1
    for d in range(1, B + 1):
        if B % d == 0 and d * T <= 1024:
            Bb = d
    nb = B // Bb
    BT = Bb * T

    xpad = jnp.pad(x, ((0, 0), (pad, pad), (0, 0))).astype(_MXU_DTYPE)

    def stack(fn, dt):
        return jnp.stack([fn(p) for p in params_list]).astype(dt)

    w1 = stack(lambda p: jnp.transpose(p["w_conv1"], (2, 1, 0)).reshape(K * C, F), _MXU_DTYPE)
    b1 = stack(lambda p: p["b_conv1"].reshape(1, F), jnp.float32)
    w2 = stack(lambda p: jnp.transpose(p["w_conv2"], (2, 1, 0)).reshape(K * F, F), _MXU_DTYPE)
    b2 = stack(lambda p: p["b_conv2"].reshape(1, F), jnp.float32)
    wl = stack(lambda p: p["w_lin"].reshape(1, F), _MXU_DTYPE)
    bl = stack(lambda p: p["b_lin"].reshape(1, 1), jnp.float32)

    kernel = functools.partial(_predictor_kernel, T=T, K=K, pad=pad, Bb=Bb)
    out = pl.pallas_call(
        kernel,
        out_shape=jax.ShapeDtypeStruct((P, nb, 1, BT), jnp.float32),
        grid_spec=pltpu.PrefetchScalarGridSpec(
            num_scalar_prefetch=0,
            grid=(P, nb),
            in_specs=[
                pl.BlockSpec((Bb, Tp, C), lambda p, b: (b, 0, 0)),
                pl.BlockSpec((1, K * C, F), lambda p, b: (p, 0, 0)),
                pl.BlockSpec((1, 1, F), lambda p, b: (p, 0, 0)),
                pl.BlockSpec((1, K * F, F), lambda p, b: (p, 0, 0)),
                pl.BlockSpec((1, 1, F), lambda p, b: (p, 0, 0)),
                pl.BlockSpec((1, 1, F), lambda p, b: (p, 0, 0)),
                pl.BlockSpec((1, 1, 1), lambda p, b: (p, 0, 0)),
            ],
            out_specs=pl.BlockSpec((1, 1, 1, BT), lambda p, b: (p, b, 0, 0)),
            scratch_shapes=[
                pltpu.VMEM((BT, K * C), _MXU_DTYPE),
                pltpu.VMEM((Bb, Tp, F), _MXU_DTYPE),
                pltpu.VMEM((BT, K * F), _MXU_DTYPE),
            ],
        ),
        compiler_params=pltpu.CompilerParams(
            dimension_semantics=("parallel", "parallel"),
            vmem_limit_bytes=_VMEM_LIMIT),
    )(xpad, w1, b1, w2, b2, wl, bl)
    # TODO(synk): for very long sequences add a T-tile grid axis with a (K-1)-row halo per
    # conv; kept single-block in T here since VarianceAdaptor caps frames at max_frames.
    return out.reshape(P, B, T)


# --------------------------------------------------------------------------------------
# Device-side repeat_interleave tables (replaces the host round trip)
# --------------------------------------------------------------------------------------
@functools.partial(jax.jit, static_argnames=("seq_len", "max_frames", "Tep"))
def build_expand_tables(D, seq_len, max_frames, Tep):
    # Matches torch: D.long().clamp(min=0)  (float durations truncate toward zero).
    D32 = jnp.maximum(D.astype(jnp.int32), 0)
    csum = jnp.cumsum(D32, axis=1)                       # (B, S) inclusive cumsum
    total = csum[:, -1]
    lens = jnp.minimum(total, max_frames).astype(jnp.int32)
    t = jnp.arange(Tep, dtype=jnp.int32)
    # src[b, t] = searchsorted_right(csum[b], t) = #{i : csum[b, i] <= t}
    src = jnp.sum((t[None, :, None] >= csum[:, None, :]).astype(jnp.int32), axis=-1)
    src = jnp.minimum(src, seq_len - 1)
    src = jnp.where(t[None, :] < lens[:, None], src, 0).astype(jnp.int32)
    max_T = jnp.maximum(jnp.minimum(jnp.max(total), max_frames), 1)
    return src, lens, max_T


# --------------------------------------------------------------------------------------
# Fused expand_hidden + pitch/energy projection residual
# --------------------------------------------------------------------------------------
def _expand_adapt_kernel(idx_ref, len_ref, h_ref, p_ref, e_ref, wp_ref, we_ref, bsum_ref,
                         hexp_ref, hadapt_ref, gbuf_ref, *, tile):
    # idx_ref : (B, Tep) int32 SMEM  source-row index per expanded frame (scalar prefetch)
    # len_ref : (B,)     int32 SMEM  valid expanded frames per batch element
    # h_ref   : (1, S, C) f32        hidden states of batch b (resident across frame tiles)
    # p_ref/e_ref : (1, tile, 1) f32 pitch / energy values for this tile
    # wp/we   : (1, C) f32           Linear(1, C) weights; bsum = pitch bias + energy bias
    # outs    : (1, tile, C) f32     H_expanded and H_adapted tiles (one store each)
    # gbuf_ref: (tile, C) f32 VMEM gather staging buffer
    b = pl.program_id(0)
    t0 = pl.program_id(1) * tile

    def gather_row(i, carry):
        src = idx_ref[b, t0 + i]
        gbuf_ref[pl.ds(i, 1), :] = h_ref[0, pl.ds(src, 1), :]   # exact f32 row copy
        return carry

    lax.fori_loop(0, tile, gather_row, 0, unroll=8)

    rows = lax.broadcasted_iota(jnp.int32, (tile, 1), 0) + t0
    g = jnp.where(rows < len_ref[b], gbuf_ref[...], 0.0)        # one tile-wide select
    hexp_ref[0] = g.astype(hexp_ref.dtype)
    hadapt_ref[0] = (g + p_ref[0] * wp_ref[...] + e_ref[0] * we_ref[...]
                     + bsum_ref[...]).astype(hadapt_ref.dtype)


def expand_and_adapt(H, idx, lens, P_pad, E_pad, pitch_proj, energy_proj, *, Tep, tile):
    B, S, C = H.shape
    wp = pitch_proj["w"][:, 0].reshape(1, C).astype(jnp.float32)
    we = energy_proj["w"][:, 0].reshape(1, C).astype(jnp.float32)
    bsum = (pitch_proj["b"] + energy_proj["b"]).reshape(1, C).astype(jnp.float32)

    kernel = functools.partial(_expand_adapt_kernel, tile=tile)
    hexp, hadapt = pl.pallas_call(
        kernel,
        out_shape=(jax.ShapeDtypeStruct((B, Tep, C), jnp.float32),
                   jax.ShapeDtypeStruct((B, Tep, C), jnp.float32)),
        grid_spec=pltpu.PrefetchScalarGridSpec(
            num_scalar_prefetch=2,
            grid=(B, Tep // tile),
            in_specs=[
                pl.BlockSpec((1, S, C), lambda b, t, i_ref, l_ref: (b, 0, 0)),
                pl.BlockSpec((1, tile, 1), lambda b, t, i_ref, l_ref: (b, t, 0)),
                pl.BlockSpec((1, tile, 1), lambda b, t, i_ref, l_ref: (b, t, 0)),
                pl.BlockSpec((1, C), lambda b, t, i_ref, l_ref: (0, 0)),
                pl.BlockSpec((1, C), lambda b, t, i_ref, l_ref: (0, 0)),
                pl.BlockSpec((1, C), lambda b, t, i_ref, l_ref: (0, 0)),
            ],
            out_specs=[pl.BlockSpec((1, tile, C), lambda b, t, i_ref, l_ref: (b, t, 0)),
                       pl.BlockSpec((1, tile, C), lambda b, t, i_ref, l_ref: (b, t, 0))],
            scratch_shapes=[pltpu.VMEM((tile, C), jnp.float32)],
        ),
        compiler_params=pltpu.CompilerParams(
            dimension_semantics=("parallel", "parallel"),
            vmem_limit_bytes=_VMEM_LIMIT),
    )(idx, lens, H, P_pad, E_pad, wp, we, bsum)
    return hexp, hadapt


# --------------------------------------------------------------------------------------
# Standalone adapt kernel (inference path, where P/E are predicted after the expand)
# --------------------------------------------------------------------------------------
def _adapt_kernel(h_ref, p_ref, e_ref, wp_ref, we_ref, bsum_ref, out_ref):
    out_ref[0] = (h_ref[0] + p_ref[0] * wp_ref[...] + e_ref[0] * we_ref[...]
                  + bsum_ref[...]).astype(out_ref.dtype)


def adapt_forward(H_exp, P, E, pitch_proj, energy_proj):
    B, Tq, C = H_exp.shape
    wp = pitch_proj["w"][:, 0].reshape(1, C).astype(jnp.float32)
    we = energy_proj["w"][:, 0].reshape(1, C).astype(jnp.float32)
    bsum = (pitch_proj["b"] + energy_proj["b"]).reshape(1, C).astype(jnp.float32)
    Pe = P.astype(jnp.float32)[..., None]
    Ee = E.astype(jnp.float32)[..., None]
    return pl.pallas_call(
        _adapt_kernel,
        out_shape=jax.ShapeDtypeStruct((B, Tq, C), jnp.float32),
        grid_spec=pltpu.PrefetchScalarGridSpec(
            num_scalar_prefetch=0,
            grid=(B,),
            in_specs=[
                pl.BlockSpec((1, Tq, C), lambda b: (b, 0, 0)),
                pl.BlockSpec((1, Tq, 1), lambda b: (b, 0, 0)),
                pl.BlockSpec((1, Tq, 1), lambda b: (b, 0, 0)),
                pl.BlockSpec((1, C), lambda b: (0, 0)),
                pl.BlockSpec((1, C), lambda b: (0, 0)),
                pl.BlockSpec((1, C), lambda b: (0, 0)),
            ],
            out_specs=pl.BlockSpec((1, Tq, C), lambda b: (b, 0, 0)),
        ),
        compiler_params=pltpu.CompilerParams(
            dimension_semantics=("parallel",),
            vmem_limit_bytes=_VMEM_LIMIT),
    )(H_exp, Pe, Ee, wp, we, bsum)


def _pad_frames(P, Tep):
    return jnp.pad(P.astype(jnp.float32), ((0, 0), (0, Tep - P.shape[1])))[..., None]


# --------------------------------------------------------------------------------------
# VarianceAdaptor.forward
# --------------------------------------------------------------------------------------
def variance_adaptor_forward(params, H, D_gt=None, P_gt=None, E_gt=None,
                             is_inference=False, max_frames=80):
    """Mirrors VarianceAdaptor.forward.  H: (B, S, d_model), channels-last."""
    B, S, C = H.shape
    tile = min(512, _round_up(max_frames, 8))   # whole expanded length in one tile when possible
    Tep = _round_up(max_frames, tile)

    D_pred = predictors_forward(H, [params["duration_predictor"]])[0]        # (B, S)
    D = D_pred if is_inference else D_gt

    idx, lens, max_T_dev = build_expand_tables(D, S, max_frames, Tep)
    # TODO(synk): max_T is a data-dependent output length, so one scalar host sync is
    # unavoidable here; the index table / gather / predictors all stay on device.
    max_T = int(jax.device_get(max_T_dev))

    if is_inference:
        P_in = jnp.zeros((B, Tep, 1), jnp.float32)
        E_in = jnp.zeros((B, Tep, 1), jnp.float32)
    else:
        P_in = _pad_frames(P_gt, Tep)
        E_in = _pad_frames(E_gt, Tep)

    H_exp_pad, H_adapt_pad = expand_and_adapt(
        H, idx, lens, P_in, E_in, params["pitch_proj"], params["energy_proj"],
        Tep=Tep, tile=tile)
    H_exp = H_exp_pad[:, :max_T]

    pe = predictors_forward(H_exp, [params["pitch_predictor"], params["energy_predictor"]])
    P_pred, E_pred = pe[0], pe[1]                                             # (B, max_T) each

    if is_inference:
        H_adapted = adapt_forward(H_exp, P_pred, E_pred,
                                  params["pitch_proj"], params["energy_proj"])
    else:
        H_adapted = H_adapt_pad[:, :max_T]
    return H_adapted, D_pred, P_pred, E_pred


# --------------------------------------------------------------------------------------
# Parameter init (PyTorch-like uniform fan-in) and pure-JAX/numpy reference
# --------------------------------------------------------------------------------------
def _init_predictor(key, in_dim, filter_size, kernel_size):
    ks = jax.random.split(key, 6)
    b1 = 1.0 / (in_dim * kernel_size) ** 0.5
    b2 = 1.0 / (filter_size * kernel_size) ** 0.5
    b3 = 1.0 / filter_size ** 0.5
    return {
        "w_conv1": jax.random.uniform(ks[0], (filter_size, in_dim, kernel_size),
                                      jnp.float32, -b1, b1),
        "b_conv1": jax.random.uniform(ks[1], (filter_size,), jnp.float32, -b1, b1),
        "w_conv2": jax.random.uniform(ks[2], (filter_size, filter_size, kernel_size),
                                      jnp.float32, -b2, b2),
        "b_conv2": jax.random.uniform(ks[3], (filter_size,), jnp.float32, -b2, b2),
        "w_lin": jax.random.uniform(ks[4], (1, filter_size), jnp.float32, -b3, b3),
        "b_lin": jax.random.uniform(ks[5], (1,), jnp.float32, -b3, b3),
    }


def _init_linear(key, in_dim, out_dim):
    ks = jax.random.split(key, 2)
    b = 1.0 / in_dim ** 0.5
    return {"w": jax.random.uniform(ks[0], (out_dim, in_dim), jnp.float32, -b, b),
            "b": jax.random.uniform(ks[1], (out_dim,), jnp.float32, -b, b)}


def init_variance_adaptor_params(key, d_model=128, filter_size=128, kernel_size=3):
    ks = jax.random.split(key, 5)
    return {
        "duration_predictor": _init_predictor(ks[0], d_model, filter_size, kernel_size),
        "pitch_predictor": _init_predictor(ks[1], d_model, filter_size, kernel_size),
        "energy_predictor": _init_predictor(ks[2], d_model, filter_size, kernel_size),
        "pitch_proj": _init_linear(ks[3], 1, d_model),
        "energy_proj": _init_linear(ks[4], 1, d_model),
    }


def _ref_predictor(x, p, mxu_dtype=_MXU_DTYPE):
    """Mirrors DurationPredictor/PitchPredictor with the same bf16 MXU-operand rounding
    the kernel uses (accumulation stays f32; ReLU / bias math in f32)."""
    x_ncl = jnp.transpose(x, (0, 2, 1))

    def conv(inp, w, b):
        dn = lax.conv_dimension_numbers(inp.shape, w.shape, ("NCH", "OIH", "NCH"))
        y = lax.conv_general_dilated(inp.astype(mxu_dtype), w.astype(mxu_dtype),
                                     window_strides=(1,), padding=[(1, 1)],
                                     dimension_numbers=dn,
                                     preferred_element_type=jnp.float32)
        return y + b[None, :, None]

    h = jax.nn.relu(conv(x_ncl, p["w_conv1"], p["b_conv1"]))
    h = jax.nn.relu(conv(h, p["w_conv2"], p["b_conv2"]))
    h = jnp.transpose(h, (0, 2, 1))
    s = jnp.dot(h.astype(mxu_dtype), jnp.transpose(p["w_lin"]).astype(mxu_dtype),
                preferred_element_type=jnp.float32) + p["b_lin"]
    return s[..., 0]


def _ref_expand_hidden(H, D, max_frames):
    H_np = np.asarray(jax.device_get(H))
    D_np = np.clip(np.asarray(jax.device_get(D)).astype(np.int64), 0, None)
    B, S, C = H_np.shape
    max_T = int(min(D_np.sum(axis=1).max(), max_frames))
    max_T = max(max_T, 1)
    out = np.zeros((B, max_T, C), np.float32)
    for b in range(B):
        rep = np.repeat(np.arange(S), D_np[b])[:max_T]
        out[b, :rep.shape[0]] = H_np[b, rep]
    return jnp.asarray(out), max_T


def _ref_variance_adaptor(params, H, D_gt, P_gt, E_gt, max_frames):
    D_pred = _ref_predictor(H, params["duration_predictor"])
    H_exp, _ = _ref_expand_hidden(H, D_gt, max_frames)
    P_pred = _ref_predictor(H_exp, params["pitch_predictor"])
    E_pred = _ref_predictor(H_exp, params["energy_predictor"])
    P_proj = P_gt[..., None] * params["pitch_proj"]["w"][:, 0] + params["pitch_proj"]["b"]
    E_proj = E_gt[..., None] * params["energy_proj"]["w"][:, 0] + params["energy_proj"]["b"]
    H_adapted = H_exp + P_proj + E_proj
    return H_adapted, D_pred, P_pred, E_pred


# --------------------------------------------------------------------------------------
if __name__ == "__main__":
    B, S, D_MODEL, FILTER, MAX_FRAMES = 2, 8, 128, 128, 24

    key = jax.random.PRNGKey(0)
    k_param, k_h, k_d, k_p, k_e = jax.random.split(key, 5)

    params = init_variance_adaptor_params(k_param, d_model=D_MODEL, filter_size=FILTER)
    H = jax.random.normal(k_h, (B, S, D_MODEL), jnp.float32)
    D_gt = jax.random.randint(k_d, (B, S), 1, 5, dtype=jnp.int32)   # durations 1..4

    max_T = int(min(int(jnp.max(jnp.sum(D_gt, axis=1))), MAX_FRAMES))
    P_gt = jax.random.normal(k_p, (B, max_T), jnp.float32)
    E_gt = jax.random.normal(k_e, (B, max_T), jnp.float32)

    outs = variance_adaptor_forward(params, H, D_gt=D_gt, P_gt=P_gt, E_gt=E_gt,
                                    is_inference=False, max_frames=MAX_FRAMES)
    outs = jax.block_until_ready(outs)
    H_adapted, D_pred, P_pred, E_pred = outs

    refs = _ref_variance_adaptor(params, H, D_gt, P_gt, E_gt, MAX_FRAMES)
    for name, got, want in zip(("H_adapted", "D_pred", "P_pred", "E_pred"), outs, refs):
        assert got.shape == want.shape, (name, got.shape, want.shape)
        diff = float(jnp.max(jnp.abs(got - want)))
        assert jnp.allclose(got, want, atol=3e-3, rtol=3e-3), f"{name} mismatch: {diff}"

    print("KERNEL_OK")
</pallas_src>

<mosaic_0001>
module attributes {stable_mosaic.version = 11 : i64} {
  func.func @_predictor_kernel(%arg0: i32, %arg1: i32, %arg2: memref<2x10x128xbf16, #tpu.memory_space<vmem>>, %arg3: memref<1x384x128xbf16, #tpu.memory_space<vmem>>, %arg4: memref<1x1x128xf32, #tpu.memory_space<vmem>>, %arg5: memref<1x384x128xbf16, #tpu.memory_space<vmem>>, %arg6: memref<1x1x128xf32, #tpu.memory_space<vmem>>, %arg7: memref<1x1x128xbf16, #tpu.memory_space<vmem>>, %arg8: memref<1x1x1xf32, #tpu.memory_space<vmem>>, %arg9: memref<1x1x1x16xf32, #tpu.memory_space<vmem>>, %arg10: memref<16x384xbf16, #tpu.memory_space<vmem>>, %arg11: memref<2x10x128xbf16, #tpu.memory_space<vmem>>, %arg12: memref<16x384xbf16, #tpu.memory_space<vmem>>) attributes {dimension_semantics = [#tpu.dimension_semantics<parallel>, #tpu.dimension_semantics<parallel>], iteration_bounds = array<i64: 1, 1>, scalar_prefetch = 0 : i64, scratch_operands = 3 : i64, tpu.core_type = #tpu.core_type<tc>, window_params = [{transform_indices = @transform_0, window_bounds = array<i64: 2, 10, 128>}, {transform_indices = @transform_1, window_bounds = array<i64: 1, 384, 128>}, {transform_indices = @transform_2, window_bounds = array<i64: 1, 1, 128>}, {transform_indices = @transform_3, window_bounds = array<i64: 1, 384, 128>}, {transform_indices = @transform_4, window_bounds = array<i64: 1, 1, 128>}, {transform_indices = @transform_5, window_bounds = array<i64: 1, 1, 128>}, {transform_indices = @transform_6, window_bounds = array<i64: 1, 1, 1>}, {transform_indices = @transform_7, window_bounds = array<i64: 1, 1, 1, 16>}]} {
    %c0 = arith.constant 0 : index
    %c0_0 = arith.constant 0 : index
    %c0_1 = arith.constant 0 : index
    %0 = vector.load %arg2[%c0, %c0_0, %c0_1] : memref<2x10x128xbf16, #tpu.memory_space<vmem>>, vector<1x8x128xbf16>
    %1 = vector.shape_cast %0 : vector<1x8x128xbf16> to vector<8x128xbf16>
    %c0_2 = arith.constant 0 : index
    %c0_3 = arith.constant 0 : index
    %2 = vector.load %arg10[%c0_2, %c0_3] : memref<16x384xbf16, #tpu.memory_space<vmem>>, vector<8x128xbf16>
    tpu.vector_store %arg10[%c0_2, %c0_3], %1 {strides = array<i32>} : memref<16x384xbf16, #tpu.memory_space<vmem>>, vector<8x128xbf16>,
    %c0_4 = arith.constant 0 : index
    %c1 = arith.constant 1 : index
    %c0_5 = arith.constant 0 : index
    %3 = vector.load %arg2[%c0_4, %c1, %c0_5] : memref<2x10x128xbf16, #tpu.memory_space<vmem>>, vector<1x8x128xbf16>
    %4 = vector.shape_cast %3 : vector<1x8x128xbf16> to vector<8x128xbf16>
    %c0_6 = arith.constant 0 : index
    %c128 = arith.constant 128 : index
    %5 = vector.load %arg10[%c0_6, %c128] : memref<16x384xbf16, #tpu.memory_space<vmem>>, vector<8x128xbf16>
    tpu.vector_store %arg10[%c0_6, %c128], %4 {strides = array<i32>} : memref<16x384xbf16, #tpu.memory_space<vmem>>, vector<8x128xbf16>,
    %c0_7 = arith.constant 0 : index
    %c2 = arith.constant 2 : index
    %c0_8 = arith.constant 0 : index
    %6 = vector.load %arg2[%c0_7, %c2, %c0_8] : memref<2x10x128xbf16, #tpu.memory_space<vmem>>, vector<1x8x128xbf16>
    %7 = vector.shape_cast %6 : vector<1x8x128xbf16> to vector<8x128xbf16>
    %c0_9 = arith.constant 0 : index
    %c256 = arith.constant 256 : index
    %8 = vector.load %arg10[%c0_9, %c256] : memref<16x384xbf16, #tpu.memory_space<vmem>>, vector<8x128xbf16>
    tpu.vector_store %arg10[%c0_9, %c256], %7 {strides = array<i32>} : memref<16x384xbf16, #tpu.memory_space<vmem>>, vector<8x128xbf16>,
    %c1_10 = arith.constant 1 : index
    %c0_11 = arith.constant 0 : index
    %c0_12 = arith.constant 0 : index
    %9 = vector.load %arg2[%c1_10, %c0_11, %c0_12] : memref<2x10x128xbf16, #tpu.memory_space<vmem>>, vector<1x8x128xbf16>
    %10 = vector.shape_cast %9 : vector<1x8x128xbf16> to vector<8x128xbf16>
    %c8 = arith.constant 8 : index
    %c0_13 = arith.constant 0 : index
    %11 = vector.load %arg10[%c8, %c0_13] : memref<16x384xbf16, #tpu.memory_space<vmem>>, vector<8x128xbf16>
    tpu.vector_store %arg10[%c8, %c0_13], %10 {strides = array<i32>} : memref<16x384xbf16, #tpu.memory_space<vmem>>, vector<8x128xbf16>,
    %c1_14 = arith.constant 1 : index
    %c1_15 = arith.constant 1 : index
    %c0_16 = arith.constant 0 : index
    %12 = vector.load %arg2[%c1_14, %c1_15, %c0_16] : memref<2x10x128xbf16, #tpu.memory_space<vmem>>, vector<1x8x128xbf16>
    %13 = vector.shape_cast %12 : vector<1x8x128xbf16> to vector<8x128xbf16>
    %c8_17 = arith.constant 8 : index
    %c128_18 = arith.constant 128 : index
    %14 = vector.load %arg10[%c8_17, %c128_18] : memref<16x384xbf16, #tpu.memory_space<vmem>>, vector<8x128xbf16>
    tpu.vector_store %arg10[%c8_17, %c128_18], %13 {strides = array<i32>} : memref<16x384xbf16, #tpu.memory_space<vmem>>, vector<8x128xbf16>,
    %c1_19 = arith.constant 1 : index
    %c2_20 = arith.constant 2 : index
    %c0_21 = arith.constant 0 : index
    %15 = vector.load %arg2[%c1_19, %c2_20, %c0_21] : memref<2x10x128xbf16, #tpu.memory_space<vmem>>, vector<1x8x128xbf16>
    %16 = vector.shape_cast %15 : vector<1x8x128xbf16> to vector<8x128xbf16>
    %c8_22 = arith.constant 8 : index
    %c256_23 = arith.constant 256 : index
    %17 = vector.load %arg10[%c8_22, %c256_23] : memref<16x384xbf16, #tpu.memory_space<vmem>>, vector<8x128xbf16>
    tpu.vector_store %arg10[%c8_22, %c256_23], %16 {strides = array<i32>} : memref<16x384xbf16, #tpu.memory_space<vmem>>, vector<8x128xbf16>,
    %c0_24 = arith.constant 0 : index
    %c0_25 = arith.constant 0 : index
    %18 = vector.load %arg10[%c0_24, %c0_25] : memref<16x384xbf16, #tpu.memory_space<vmem>>, vector<16x384xbf16>
    %c0_26 = arith.constant 0 : index
    %c0_27 = arith.constant 0 : index
    %c0_28 = arith.constant 0 : index
    %19 = vector.load %arg3[%c0_26, %c0_27, %c0_28] : memref<1x384x128xbf16, #tpu.memory_space<vmem>>, vector<1x384x128xbf16>
    %20 = vector.shape_cast %19 : vector<1x384x128xbf16> to vector<384x128xbf16>
    %cst = arith.constant dense<0.000000e+00> : vector<16x128xf32>
    %21 = tpu.matmul %18, %20, %cst {dimension_numbers = #tpu.dot_dimension_numbers<[1], [0], [0], [1], [0, 0, 1, 1], [], []>} : vector<16x384xbf16>, vector<384x128xbf16>, vector<16x128xf32> -> vector<16x128xf32>
    %c0_29 = arith.constant 0 : index
    %c0_30 = arith.constant 0 : index
    %c0_31 = arith.constant 0 : index
    %22 = vector.load %arg4[%c0_29, %c0_30, %c0_31] : memref<1x1x128xf32, #tpu.memory_space<vmem>>, vector<1x1x128xf32>
    %23 = vector.shape_cast %22 : vector<1x1x128xf32> to vector<1x128xf32>
    %24 = vector.broadcast %23 : vector<1x128xf32> to vector<16x128xf32>
    %25 = arith.addf %21, %24 : vector<16x128xf32>
    %cst_32 = arith.constant 0.000000e+00 : f32
    %26 = vector.broadcast %cst_32 : f32 to vector<16x128xf32>
    %27 = arith.maximumf %25, %26 : vector<16x128xf32>
    %cst_33 = arith.constant 0.000000e+00 : bf16
    %28 = vector.broadcast %cst_33 : bf16 to vector<2x1x128xbf16>
    %c0_34 = arith.constant 0 : index
    %c0_35 = arith.constant 0 : index
    %c0_36 = arith.constant 0 : index
    %29 = vector.load %arg11[%c0_34, %c0_35, %c0_36] : memref<2x10x128xbf16, #tpu.memory_space<vmem>>, vector<2x1x128xbf16>
    tpu.vector_store %arg11[%c0_34, %c0_35, %c0_36], %28 {strides = array<i32>} : memref<2x10x128xbf16, #tpu.memory_space<vmem>>, vector<2x1x128xbf16>,
    %cst_37 = arith.constant 0.000000e+00 : bf16
    %30 = vector.broadcast %cst_37 : bf16 to vector<2x1x128xbf16>
    %c0_38 = arith.constant 0 : index
    %c9 = arith.constant 9 : index
    %c0_39 = arith.constant 0 : index
    %31 = vector.load %arg11[%c0_38, %c9, %c0_39] : memref<2x10x128xbf16, #tpu.memory_space<vmem>>, vector<2x1x128xbf16>
    tpu.vector_store %arg11[%c0_38, %c9, %c0_39], %30 {strides = array<i32>} : memref<2x10x128xbf16, #tpu.memory_space<vmem>>, vector<2x1x128xbf16>,
    %32 = vector.extract_strided_slice %27 {offsets = [0, 0], sizes = [8, 128], strides = [1, 1]} : vector<16x128xf32> to vector<8x128xf32>
    %33 = arith.truncf %32 : vector<8x128xf32> to vector<8x128xbf16>
    %c0_40 = arith.constant 0 : index
    %c1_41 = arith.constant 1 : index
    %c0_42 = arith.constant 0 : index
    %34 = vector.load %arg11[%c0_40, %c1_41, %c0_42] : memref<2x10x128xbf16, #tpu.memory_space<vmem>>, vector<1x8x128xbf16>
    %35 = vector.shape_cast %34 : vector<1x8x128xbf16> to vector<8x128xbf16>
    %36 = vector.shape_cast %33 : vector<8x128xbf16> to vector<1x8x128xbf16>
    tpu.vector_store %arg11[%c0_40, %c1_41, %c0_42], %36 {strides = array<i32>} : memref<2x10x128xbf16, #tpu.memory_space<vmem>>, vector<1x8x128xbf16>,
    %37 = vector.extract_strided_slice %27 {offsets = [8, 0], sizes = [8, 128], strides = [1, 1]} : vector<16x128xf32> to vector<8x128xf32>
    %38 = arith.truncf %37 : vector<8x128xf32> to vector<8x128xbf16>
    %c1_43 = arith.constant 1 : index
    %c1_44 = arith.constant 1 : index
    %c0_45 = arith.constant 0 : index
    %39 = vector.load %arg11[%c1_43, %c1_44, %c0_45] : memref<2x10x128xbf16, #tpu.memory_space<vmem>>, vector<1x8x128xbf16>
    %40 = vector.shape_cast %39 : vector<1x8x128xbf16> to vector<8x128xbf16>
    %41 = vector.shape_cast %38 : vector<8x128xbf16> to vector<1x8x128xbf16>
    tpu.vector_store %arg11[%c1_43, %c1_44, %c0_45], %41 {strides = array<i32>} : memref<2x10x128xbf16, #tpu.memory_space<vmem>>, vector<1x8x128xbf16>,
    %c0_46 = arith.constant 0 : index
    %c0_47 = arith.constant 0 : index
    %c0_48 = arith.constant 0 : index
    %42 = vector.load %arg11[%c0_46, %c0_47, %c0_48] : memref<2x10x128xbf16, #tpu.memory_space<vmem>>, vector<1x8x128xbf16>
    %43 = vector.shape_cast %42 : vector<1x8x128xbf16> to vector<8x128xbf16>
    %c0_49 = arith.constant 0 : index
    %c0_50 = arith.constant 0 : index
    %44 = vector.load %arg12[%c0_49, %c0_50] : memref<16x384xbf16, #tpu.memory_space<vmem>>, vector<8x128xbf16>
    tpu.vector_store %arg12[%c0_49, %c0_50], %43 {strides = array<i32>} : memref<16x384xbf16, #tpu.memory_space<vmem>>, vector<8x128xbf16>,
    %c0_51 = arith.constant 0 : index
    %c1_52 = arith.constant 1 : index
    %c0_53 = arith.constant 0 : index
    %45 = vector.load %arg11[%c0_51, %c1_52, %c0_53] : memref<2x10x128xbf16, #tpu.memory_space<vmem>>, vector<1x8x128xbf16>
    %46 = vector.shape_cast %45 : vector<1x8x128xbf16> to vector<8x128xbf16>
    %c0_54 = arith.constant 0 : index
    %c128_55 = arith.constant 128 : index
    %47 = vector.load %arg12[%c0_54, %c128_55] : memref<16x384xbf16, #tpu.memory_space<vmem>>, vector<8x128xbf16>
    tpu.vector_store %arg12[%c0_54, %c128_55], %46 {strides = array<i32>} : memref<16x384xbf16, #tpu.memory_space<vmem>>, vector<8x128xbf16>,
    %c0_56 = arith.constant 0 : index
    %c2_57 = arith.constant 2 : index
    %c0_58 = arith.constant 0 : index
    %48 = vector.load %arg11[%c0_56, %c2_57, %c0_58] : memref<2x10x128xbf16, #tpu.memory_space<vmem>>, vector<1x8x128xbf16>
    %49 = vector.shape_cast %48 : vector<1x8x128xbf16> to vector<8x128xbf16>
    %c0_59 = arith.constant 0 : index
    %c256_60 = arith.constant 256 : index
    %50 = vector.load %arg12[%c0_59, %c256_60] : memref<16x384xbf16, #tpu.memory_space<vmem>>, vector<8x128xbf16>
    tpu.vector_store %arg12[%c0_59, %c256_60], %49 {strides = array<i32>} : memref<16x384xbf16, #tpu.memory_space<vmem>>, vector<8x128xbf16>,
    %c1_61 = arith.constant 1 : index
    %c0_62 = arith.constant 0 : index
    %c0_63 = arith.constant 0 : index
    %51 = vector.load %arg11[%c1_61, %c0_62, %c0_63] : memref<2x10x128xbf16, #tpu.memory_space<vmem>>, vector<1x8x128xbf16>
    %52 = vector.shape_cast %51 : vector<1x8x128xbf16> to vector<8x128xbf16>
    %c8_64 = arith.constant 8 : index
    %c0_65 = arith.constant 0 : index
    %53 = vector.load %arg12[%c8_64, %c0_65] : memref<16x384xbf16, #tpu.memory_space<vmem>>, vector<8x128xbf16>
    tpu.vector_store %arg12[%c8_64, %c0_65], %52 {strides = array<i32>} : memref<16x384xbf16, #tpu.memory_space<vmem>>, vector<8x128xbf16>,
    %c1_66 = arith.constant 1 : index
    %c1_67 = arith.constant 1 : index
    %c0_68 = arith.constant 0 : index
    %54 = vector.load %arg11[%c1_66, %c1_67, %c0_68] : memref<2x10x128xbf16, #tpu.memory_space<vmem>>, vector<1x8x128xbf16>
    %55 = vector.shape_cast %54 : vector<1x8x128xbf16> to vector<8x128xbf16>
    %c8_69 = arith.constant 8 : index
    %c128_70 = arith.constant 128 : index
    %56 = vector.load %arg12[%c8_69, %c128_70] : memref<16x384xbf16, #tpu.memory_space<vmem>>, vector<8x128xbf16>
    tpu.vector_store %arg12[%c8_69, %c128_70], %55 {strides = array<i32>} : memref<16x384xbf16, #tpu.memory_space<vmem>>, vector<8x128xbf16>,
    %c1_71 = arith.constant 1 : index
    %c2_72 = arith.constant 2 : index
    %c0_73 = arith.constant 0 : index
    %57 = vector.load %arg11[%c1_71, %c2_72, %c0_73] : memref<2x10x128xbf16, #tpu.memory_space<vmem>>, vector<1x8x128xbf16>
    %58 = vector.shape_cast %57 : vector<1x8x128xbf16> to vector<8x128xbf16>
    %c8_74 = arith.constant 8 : index
    %c256_75 = arith.constant 256 : index
    %59 = vector.load %arg12[%c8_74, %c256_75] : memref<16x384xbf16, #tpu.memory_space<vmem>>, vector<8x128xbf16>
    tpu.vector_store %arg12[%c8_74, %c256_75], %58 {strides = array<i32>} : memref<16x384xbf16, #tpu.memory_space<vmem>>, vector<8x128xbf16>,
    %c0_76 = arith.constant 0 : index
    %c0_77 = arith.constant 0 : index
    %60 = vector.load %arg12[%c0_76, %c0_77] : memref<16x384xbf16, #tpu.memory_space<vmem>>, vector<16x384xbf16>
    %c0_78 = arith.constant 0 : index
    %c0_79 = arith.constant 0 : index
    %c0_80 = arith.constant 0 : index
    %61 = vector.load %arg5[%c0_78, %c0_79, %c0_80] : memref<1x384x128xbf16, #tpu.memory_space<vmem>>, vector<1x384x128xbf16>
    %62 = vector.shape_cast %61 : vector<1x384x128xbf16> to vector<384x128xbf16>
    %cst_81 = arith.constant dense<0.000000e+00> : vector<16x128xf32>
    %63 = tpu.matmul %60, %62, %cst_81 {dimension_numbers = #tpu.dot_dimension_numbers<[1], [0], [0], [1], [0, 0, 1, 1], [], []>} : vector<16x384xbf16>, vector<384x128xbf16>, vector<16x128xf32> -> vector<16x128xf32>
    %c0_82 = arith.constant 0 : index
    %c0_83 = arith.constant 0 : index
    %c0_84 = arith.constant 0 : index
    %64 = vector.load %arg6[%c0_82, %c0_83, %c0_84] : memref<1x1x128xf32, #tpu.memory_space<vmem>>, vector<1x1x128xf32>
    %65 = vector.shape_cast %64 : vector<1x1x128xf32> to vector<1x128xf32>
    %66 = vector.broadcast %65 : vector<1x128xf32> to vector<16x128xf32>
    %67 = arith.addf %63, %66 : vector<16x128xf32>
    %cst_85 = arith.constant 0.000000e+00 : f32
    %68 = vector.broadcast %cst_85 : f32 to vector<16x128xf32>
    %69 = arith.maximumf %67, %68 : vector<16x128xf32>
    %c0_86 = arith.constant 0 : index
    %c0_87 = arith.constant 0 : index
    %c0_88 = arith.constant 0 : index
    %70 = vector.load %arg7[%c0_86, %c0_87, %c0_88] : memref<1x1x128xbf16, #tpu.memory_space<vmem>>, vector<1x1x128xbf16>
    %71 = vector.shape_cast %70 : vector<1x1x128xbf16> to vector<1x128xbf16>
    %72 = arith.truncf %69 : vector<16x128xf32> to vector<16x128xbf16>
    %cst_89 = arith.constant dense<0.000000e+00> : vector<1x16xf32>
    %73 = tpu.matmul %71, %72, %cst_89 {dimension_numbers = #tpu.dot_dimension_numbers<[1], [1], [0], [0], [0, 0, 1, 0], [], []>} : vector<1x128xbf16>, vector<16x128xbf16>, vector<1x16xf32> -> vector<1x16xf32>
    %c0_90 = arith.constant 0 : index
    %c0_91 = arith.constant 0 : index
    %c0_92 = arith.constant 0 : index
    %74 = vector.load %arg8[%c0_90, %c0_91, %c0_92] : memref<1x1x1xf32, #tpu.memory_space<vmem>>, vector<1x1x1xf32>
    %75 = vector.shape_cast %74 : vector<1x1x1xf32> to vector<1x1xf32>
    %76 = vector.broadcast %75 : vector<1x1xf32> to vector<1x16xf32>
    %77 = arith.addf %73, %76 : vector<1x16xf32>
    %c0_93 = arith.constant 0 : index
    %c0_94 = arith.constant 0 : index
    %c0_95 = arith.constant 0 : index
    %c0_96 = arith.constant 0 : index
    %78 = vector.load %arg9[%c0_93, %c0_94, %c0_95, %c0_96] : memref<1x1x1x16xf32, #tpu.memory_space<vmem>>, vector<1x1x1x16xf32>
    %79 = vector.shape_cast %78 : vector<1x1x1x16xf32> to vector<1x16xf32>
    %80 = vector.shape_cast %77 : vector<1x16xf32> to vector<1x1x1x16xf32>
    tpu.vector_store %arg9[%c0_93, %c0_94, %c0_95, %c0_96], %80 {strides = array<i32>} : memref<1x1x1x16xf32, #tpu.memory_space<vmem>>, vector<1x1x1x16xf32>,
    return
  }
  func.func @transform_0(%arg0: i32, %arg1: i32) -> (i32, i32, i32) {
    %c0_i32 = arith.constant 0 : i32
    %c0_i32_0 = arith.constant 0 : i32
    %c0_i32_1 = arith.constant 0 : i32
    return %arg1, %c0_i32, %c0_i32_0 : i32, i32, i32
  }
  func.func @transform_1(%arg0: i32, %arg1: i32) -> (i32, i32, i32) {
    %c0_i32 = arith.constant 0 : i32
    %c0_i32_0 = arith.constant 0 : i32
    %c0_i32_1 = arith.constant 0 : i32
    return %arg0, %c0_i32, %c0_i32_0 : i32, i32, i32
  }
  func.func @transform_2(%arg0: i32, %arg1: i32) -> (i32, i32, i32) {
    %c0_i32 = arith.constant 0 : i32
    %c0_i32_0 = arith.constant 0 : i32
    %c0_i32_1 = arith.constant 0 : i32
    return %arg0, %c0_i32, %c0_i32_0 : i32, i32, i32
  }
  func.func @transform_3(%arg0: i32, %arg1: i32) -> (i32, i32, i32) {
    %c0_i32 = arith.constant 0 : i32
    %c0_i32_0 = arith.constant 0 : i32
    %c0_i32_1 = arith.constant 0 : i32
    return %arg0, %c0_i32, %c0_i32_0 : i32, i32, i32
  }
  func.func @transform_4(%arg0: i32, %arg1: i32) -> (i32, i32, i32) {
    %c0_i32 = arith.constant 0 : i32
    %c0_i32_0 = arith.constant 0 : i32
    %c0_i32_1 = arith.constant 0 : i32
    return %arg0, %c0_i32, %c0_i32_0 : i32, i32, i32
  }
  func.func @transform_5(%arg0: i32, %arg1: i32) -> (i32, i32, i32) {
    %c0_i32 = arith.constant 0 : i32
    %c0_i32_0 = arith.constant 0 : i32
    %c0_i32_1 = arith.constant 0 : i32
    return %arg0, %c0_i32, %c0_i32_0 : i32, i32, i32
  }
  func.func @transform_6(%arg0: i32, %arg1: i32) -> (i32, i32, i32) {
    %c0_i32 = arith.constant 0 : i32
    %c0_i32_0 = arith.constant 0 : i32
    %c0_i32_1 = arith.constant 0 : i32
    return %arg0, %c0_i32, %c0_i32_0 : i32, i32, i32
  }
  func.func @transform_7(%arg0: i32, %arg1: i32) -> (i32, i32, i32, i32) {
    %c0_i32 = arith.constant 0 : i32
    %c0_i32_0 = arith.constant 0 : i32
    %c0_i32_1 = arith.constant 0 : i32
    return %arg0, %arg1, %c0_i32, %c0_i32_0 : i32, i32, i32, i32
  }
}

</mosaic_0001>

<llo_original>
// kernel: tpu_custom_call.1
$region0: #{tpu_custom_call.1}
  #allocation0 [shape = 'u32[]', space=smem, size = 0x4, offset = 0x4, fixed_abs, tag = 'smem constant byte address 0x4 - core index']
  #allocation1 [shape = 'u32[144,128]{1,0:T(1,128)}', space=vmem, size = 0x12000, scoped, tag = 'internal scratch']
  #allocation2 [shape = 'bf16[16,384]{1,0:T(16,128)(2,1)}', space=vmem, size = 0x3000, scoped, tag = 'scratch operand']
  #allocation3 [shape = 'bf16[2,10,128]{2,1,0:T(8,128)(2,1)}', space=vmem, size = 0x2000, scoped, tag = 'scratch operand']
  #allocation4 [shape = 'bf16[16,384]{1,0:T(16,128)(2,1)}', space=vmem, size = 0x3000, scoped, tag = 'scratch operand']
  #allocation5 [shape = 'f32[1,1,1]{2,1,0:T(1,128)S(1)}', space=vmem, size = 0x200, scoped, tag = 'scoped memory for tpu_custom_call.1']
  %s0 = inlined_call_operand.vmem [shape: bf16[2,10,128], index: 0, kind: input, shape index: {}]
  %s1 = inlined_call_operand.hbm [shape: bf16[1,384,128], index: 1, kind: input, shape index: {}]
  %s2 = inlined_call_operand.vmem [shape: f32[1,1,128], index: 2, kind: input, shape index: {}]
  %s3 = inlined_call_operand.hbm [shape: bf16[1,384,128], index: 3, kind: input, shape index: {}]
  %s4 = inlined_call_operand.vmem [shape: f32[1,1,128], index: 4, kind: input, shape index: {}]
  %s5 = inlined_call_operand.vmem [shape: bf16[1,1,128], index: 5, kind: input, shape index: {}]
  %s6 = inlined_call_operand.<no memory space> [shape: f32[1,1,1], index: 6, kind: input, shape index: {}]
  %s7 = inlined_call_operand.hbm [shape: f32[1,1,1,16], index: 7, kind: output, shape index: {}]
  %s8 = sld [smem:[#allocation0]]
  $region46: #{tpu_custom_call.1} parent=0
    _
  %s10 = ssub.s32 1, %s8
  %s11 = scalar_select 0, %s10, %s8
  %v12 = vstv %s6
  %13 = vst [vmem:[#allocation5] sm:$0x1] %v12
  $region1: #{tpu_custom_call.1} parent=0
    #allocation6 [shape = 'u8[98304]{0}', space=vmem, size = 0x18000, scoped, tag = 'input window, operand 1, single buffered']
    #allocation7 [shape = 's32[1]{0}', space=sflag, size = 0x4, scoped, tag = 'scoped memory for tpu_custom_call.1']
    #allocation8 [shape = 's32[1]{0}', space=sflag, size = 0x4, scoped, tag = 'scoped memory for tpu_custom_call.1']
    #allocation9 [shape = 'u8[98304]{0}', space=vmem, size = 0x18000, scoped, tag = 'input window, operand 3, single buffered']
    #allocation10 [shape = 's32[1]{0}', space=sflag, size = 0x4, scoped, tag = 'scoped memory for tpu_custom_call.1']
    #allocation11 [shape = 'u8[512]{0}', space=vmem, size = 0x400, scoped, tag = 'output window, operand 0, single buffered']
    %14 = vsyncpa [#allocation7], 0
    %15 = vsyncpa [#allocation10], 0
    %16 = vsyncpa [#allocation8], 0
    // Predicated region
    $region2: #{tpu_custom_call.1} parent=1 // pred_check
      _
    $region3: #{tpu_custom_call.1} parent=1 // pred_check_branch
      %18 = sbr.rel (0) target = $region5
    $region4: #{tpu_custom_call.1} parent=1 // pred_region
      _
    $region5: #{tpu_custom_call.1} parent=1 // pred_fallthru
      _
    // Predicated region
    $region6: #{tpu_custom_call.1} parent=1 // pred_check
      _
    $region7: #{tpu_custom_call.1} parent=1 // pred_check_branch
      %20 = sbr.rel (0) target = $region9
    $region8: #{tpu_custom_call.1} parent=1 // pred_region
      %s22 = ssub.s32 3072, 3072
      %23 = vsyncadd [#allocation7], %s22
      %s24 = sshll.u32 [#allocation6], 4
      %s25 = int_to_ptr.vmem [resolvable:$true] %s24
      %30 = dma.hbm_to_vmem [thread:$0]  %s1, 3072, %s25, [#allocation7], 64, 64, 4
    $region9: #{tpu_custom_call.1} parent=1 // pred_fallthru
      _
    // Predicated region
    $region10: #{tpu_custom_call.1} parent=1 // pred_check
      _
    $region11: #{tpu_custom_call.1} parent=1 // pred_check_branch
      %32 = sbr.rel (0) target = $region13
    $region12: #{tpu_custom_call.1} parent=1 // pred_region
      _
    $region13: #{tpu_custom_call.1} parent=1 // pred_fallthru
      _
    // Predicated region
    $region14: #{tpu_custom_call.1} parent=1 // pred_check
      _
    $region15: #{tpu_custom_call.1} parent=1 // pred_check_branch
      %34 = sbr.rel (0) target = $region17
    $region16: #{tpu_custom_call.1} parent=1 // pred_region
      %s36 = ssub.s32 3072, 3072
      %37 = vsyncadd [#allocation10], %s36
      %s38 = sshll.u32 [#allocation9], 4
      %s39 = int_to_ptr.vmem [resolvable:$true] %s38
      %44 = dma.hbm_to_vmem [thread:$0]  %s3, 3072, %s39, [#allocation10], 64, 64, 4
    $region17: #{tpu_custom_call.1} parent=1 // pred_fallthru
      _
    // Predicated region
    $region18: #{tpu_custom_call.1} parent=1 // pred_check
      _
    $region19: #{tpu_custom_call.1} parent=1 // pred_check_branch
      %46 = sbr.rel (0) target = $region21
    $region20: #{tpu_custom_call.1} parent=1 // pred_region
      _
    $region21: #{tpu_custom_call.1} parent=1 // pred_fallthru
      _
    // Predicated region
    $region22: #{tpu_custom_call.1} parent=1 // pred_check
      _
    $region23: #{tpu_custom_call.1} parent=1 // pred_check_branch
      %48 = sbr.rel (0) target = $region25
    $region24: #{tpu_custom_call.1} parent=1 // pred_region
      _
    $region25: #{tpu_custom_call.1} parent=1 // pred_fallthru
      _
    // Predicated region
    $region26: #{tpu_custom_call.1} parent=1 // pred_check
      _
    $region27: #{tpu_custom_call.1} parent=1 // pred_check_branch
      %50 = sbr.rel (0) target = $region29
    $region28: #{tpu_custom_call.1} parent=1 // pred_region
      _
    $region29: #{tpu_custom_call.1} parent=1 // pred_fallthru
      _
    // Predicated region
    $region30: #{tpu_custom_call.1} parent=1 // pred_check
      _
    $region31: #{tpu_custom_call.1} parent=1 // pred_check_branch
      %52 = sbr.rel (0) target = $region33
    $region32: #{tpu_custom_call.1} parent=1 // pred_region
      %53 = dma.done [#allocation7], 3072
    $region33: #{tpu_custom_call.1} parent=1 // pred_fallthru
      _
    // Predicated region
    $region34: #{tpu_custom_call.1} parent=1 // pred_check
      _
    $region35: #{tpu_custom_call.1} parent=1 // pred_check_branch
      %55 = sbr.rel (0) target = $region37
    $region36: #{tpu_custom_call.1} parent=1 // pred_region
      %56 = dma.done [#allocation10], 3072
    $region37: #{tpu_custom_call.1} parent=1 // pred_fallthru
      _
    %v58 = vld [vmem:[%s0] sm:$0xf]
    %59 = vst [vmem:[#allocation2] sm:$0xf] %v58
    %v60 = vld [vmem:[%s0] sm:$0xf]
    %v61 = vld [vmem:[%s0 + $0x4] sm:$0x1]
    %v64 = vunpack.c.l.b16 %v60
    %v65 = vunpack.c.l.b16 %v61
    %v66 = vpack.c.b16 %v65, %v64
    %v68 = vshrl.u32 %v66, 16
    %v70 = vshll.u32 %v66, 16
    %v72 = vrot.slane %v70, 1
    %v73 = vor.u32 %v68, %v72
    %75 = vst [vmem:[#allocation2 + $0x8] sm:$0xf] %v73
    %v76 = vld [vmem:[%s0] sm:$0xe]
    %v77 = vld [vmem:[%s0 + $0x4] sm:$0x1]
    %v80 = vunpack.c.l.b16 %v76
    %v81 = vunpack.c.l.b16 %v77
    %v82 = vpack.c.b16 %v81, %v80
    %v83 = vrot.slane %v82, 1
    %85 = vst [vmem:[#allocation2 + $0x10] sm:$0xf] %v83
    %s86 = scalar_lea.vmem %s0, 8
    %v87 = vld [vmem:[%s86] sm:$0xf]
    %v89 = vunpack.c.l.b16 %v87
    %v90 = vpack.c.b16 %v89, %v89
    %92 = vst [vmem:[#allocation2] sm:$0xf0] %v90
    %v93 = vld [vmem:[%s86] sm:$0xf]
    %v94 = vld [vmem:[%s86 + $0x4] sm:$0x1]
    %v97 = vunpack.c.l.b16 %v93
    %v98 = vunpack.c.l.b16 %v94
    %v99 = vpack.c.b16 %v98, %v97
    %v101 = vshrl.u32 %v99, 16
    %v103 = vrot.slane %v101, 4
    %v104 = vshll.u32 %v99, 16
    %v106 = vrot.slane %v104, 5
    %v107 = vor.u32 %v103, %v106
    %109 = vst [vmem:[#allocation2 + $0x8] sm:$0xf0] %v107
    %v110 = vld [vmem:[%s86] sm:$0xe]
    %v111 = vld [vmem:[%s86 + $0x4] sm:$0x1]
    %v114 = vunpack.c.l.b16 %v110
    %v115 = vunpack.c.l.b16 %v111
    %v116 = vpack.c.b16 %v115, %v114
    %v117 = vrot.slane %v116, 5
    %119 = vst [vmem:[#allocation2 + $0x10] sm:$0xf0] %v117
    %v120 = vld [vmem:[#allocation2] sm:$0xff]
    %v121 = vld [vmem:[#allocation2 + $0x8] sm:$0xff]
    %v122 = vld [vmem:[#allocation2 + $0x10] sm:$0xff]
    %v123 = vld [vmem:[#allocation6] sm:$0xf]
    %v124 = vld [vmem:[#allocation6 + $0x4] sm:$0xf]
    %v125 = vld [vmem:[#allocation6 + $0x8] sm:$0xf]
    %v126 = vld [vmem:[#allocation6 + $0xc] sm:$0xf]
    %v127 = vld [vmem:[#allocation6 + $0x10] sm:$0xf]
    %v128 = vld [vmem:[#allocation6 + $0x14] sm:$0xf]
    %v129 = vld [vmem:[#allocation6 + $0x18] sm:$0xf]
    %v130 = vld [vmem:[#allocation6 + $0x1c] sm:$0xf]
    %v131 = vld [vmem:[#allocation6 + $0x20] sm:$0xf]
    %v132 = vld [vmem:[#allocation6 + $0x24] sm:$0xf]
    %v133 = vld [vmem:[#allocation6 + $0x28] sm:$0xf]
    %v134 = vld [vmem:[#allocation6 + $0x2c] sm:$0xf]
    %v135 = vld [vmem:[#allocation6 + $0x30] sm:$0xf]
    %v136 = vld [vmem:[#allocation6 + $0x34] sm:$0xf]
    %v137 = vld [vmem:[#allocation6 + $0x38] sm:$0xf]
    %v138 = vld [vmem:[#allocation6 + $0x3c] sm:$0xf]
    %v139 = vld [vmem:[#allocation6 + $0x40] sm:$0xf]
    %v140 = vld [vmem:[#allocation6 + $0x44] sm:$0xf]
    %v141 = vld [vmem:[#allocation6 + $0x48] sm:$0xf]
    %v142 = vld [vmem:[#allocation6 + $0x4c] sm:$0xf]
    %v143 = vld [vmem:[#allocation6 + $0x50] sm:$0xf]
    %v144 = vld [vmem:[#allocation6 + $0x54] sm:$0xf]
    %v145 = vld [vmem:[#allocation6 + $0x58] sm:$0xf]
    %v146 = vld [vmem:[#allocation6 + $0x5c] sm:$0xf]
    %v147 = vld [vmem:[#allocation6 + $0x60] sm:$0xf]
    %v148 = vld [vmem:[#allocation6 + $0x64] sm:$0xf]
    %v149 = vld [vmem:[#allocation6 + $0x68] sm:$0xf]
    %v150 = vld [vmem:[#allocation6 + $0x6c] sm:$0xf]
    %v151 = vld [vmem:[#allocation6 + $0x70] sm:$0xf]
    %v152 = vld [vmem:[#allocation6 + $0x74] sm:$0xf]
    %v153 = vld [vmem:[#allocation6 + $0x78] sm:$0xf]
    %v154 = vld [vmem:[#allocation6 + $0x7c] sm:$0xf]
    %v155 = vld [vmem:[#allocation6 + $0x80] sm:$0xf]
    %v156 = vld [vmem:[#allocation6 + $0x84] sm:$0xf]
    %v157 = vld [vmem:[#allocation6 + $0x88] sm:$0xf]
    %v158 = vld [vmem:[#allocation6 + $0x8c] sm:$0xf]
    %v159 = vld [vmem:[#allocation6 + $0x90] sm:$0xf]
    %v160 = vld [vmem:[#allocation6 + $0x94] sm:$0xf]
    %v161 = vld [vmem:[#allocation6 + $0x98] sm:$0xf]
    %v162 = vld [vmem:[#allocation6 + $0x9c] sm:$0xf]
    %v163 = vld [vmem:[#allocation6 + $0xa0] sm:$0xf]
    %v164 = vld [vmem:[#allocation6 + $0xa4] sm:$0xf]
    %v165 = vld [vmem:[#allocation6 + $0xa8] sm:$0xf]
    %v166 = vld [vmem:[#allocation6 + $0xac] sm:$0xf]
    %v167 = vld [vmem:[#allocation6 + $0xb0] sm:$0xf]
    %v168 = vld [vmem:[#allocation6 + $0xb4] sm:$0xf]
    %v169 = vld [vmem:[#allocation6 + $0xb8] sm:$0xf]
    %v170 = vld [vmem:[#allocation6 + $0xbc] sm:$0xf]
    %v171 = vld [vmem:[%s2] sm:$0x1]
    %v173 = vlaneseq
    %v174 = vshrl.u32 %v173, 7
    %v175 = vsub.s32 0, %v174
    %v176 = vrot.slane %v171, %v175
    %v226 = vunpack.c.l.b16 %v123
    %v227 = vunpack.c.l.b16 %v124
    %v228 = vunpack.c.l.b16 %v125
    %v229 = vunpack.c.l.b16 %v126
    %v230 = vunpack.c.l.b16 %v127
    %v231 = vunpack.c.l.b16 %v128
    %v232 = vunpack.c.l.b16 %v129
    %v233 = vunpack.c.l.b16 %v130
    %v234 = vunpack.c.l.b16 %v131
    %v235 = vunpack.c.l.b16 %v132
    %v236 = vunpack.c.l.b16 %v133
    %v237 = vunpack.c.l.b16 %v134
    %v238 = vunpack.c.l.b16 %v135
    %v239 = vunpack.c.l.b16 %v136
    %v240 = vunpack.c.l.b16 %v137
    %v241 = vunpack.c.l.b16 %v138
    %v242 = vunpack.c.l.b16 %v139
    %v243 = vunpack.c.l.b16 %v140
    %v244 = vunpack.c.l.b16 %v141
    %v245 = vunpack.c.l.b16 %v142
    %v246 = vunpack.c.l.b16 %v143
    %v247 = vunpack.c.l.b16 %v144
    %v248 = vunpack.c.l.b16 %v145
    %v249 = vunpack.c.l.b16 %v146
    %v250 = vunpack.c.l.b16 %v147
    %v251 = vunpack.c.l.b16 %v148
    %v252 = vunpack.c.l.b16 %v149
    %v253 = vunpack.c.l.b16 %v150
    %v254 = vunpack.c.l.b16 %v151
    %v255 = vunpack.c.l.b16 %v152
    %v256 = vunpack.c.l.b16 %v153
    %v257 = vunpack.c.l.b16 %v154
    %v258 = vunpack.c.l.b16 %v155
    %v259 = vunpack.c.l.b16 %v156
    %v260 = vunpack.c.l.b16 %v157
    %v261 = vunpack.c.l.b16 %v158
    %v262 = vunpack.c.l.b16 %v159
    %v263 = vunpack.c.l.b16 %v160
    %v264 = vunpack.c.l.b16 %v161
    %v265 = vunpack.c.l.b16 %v162
    %v266 = vunpack.c.l.b16 %v163
    %v267 = vunpack.c.l.b16 %v164
    %v268 = vunpack.c.l.b16 %v165
    %v269 = vunpack.c.l.b16 %v166
    %v270 = vunpack.c.l.b16 %v167
    %v271 = vunpack.c.l.b16 %v168
    %v272 = vunpack.c.l.b16 %v169
    %v273 = vunpack.c.l.b16 %v170
    %v274 = vpack.c.b16 %v227, %v226
    %v275 = vpack.c.b16 %v229, %v228
    %v276 = vpack.c.b16 %v231, %v230
    %v277 = vpack.c.b16 %v233, %v232
    %v278 = vpack.c.b16 %v235, %v234
    %v279 = vpack.c.b16 %v237, %v236
    %v280 = vpack.c.b16 %v239, %v238
    %v281 = vpack.c.b16 %v241, %v240
    %v282 = vpack.c.b16 %v243, %v242
    %v283 = vpack.c.b16 %v245, %v244
    %v284 = vpack.c.b16 %v247, %v246
    %v285 = vpack.c.b16 %v249, %v248
    %v286 = vpack.c.b16 %v251, %v250
    %v287 = vpack.c.b16 %v253, %v252
    %v288 = vpack.c.b16 %v255, %v254
    %v289 = vpack.c.b16 %v257, %v256
    %v290 = vpack.c.b16 %v259, %v258
    %v291 = vpack.c.b16 %v261, %v260
    %v292 = vpack.c.b16 %v263, %v262
    %v293 = vpack.c.b16 %v265, %v264
    %v294 = vpack.c.b16 %v267, %v266
    %v295 = vpack.c.b16 %v269, %v268
    %v296 = vpack.c.b16 %v271, %v270
    %v297 = vpack.c.b16 %v273, %v272
    %322 = vmatprep.subr.bf16.mxu0 0
    %323 = vmatpush1.bf16.msra.mxu0 %v274
    %324 = vmatprep.subr.bf16.mxu0 0
    %325 = vmatpush1.bf16.msra.mxu0 %v275
    %326 = vmatprep.subr.bf16.mxu0 0
    %327 = vmatpush1.bf16.msra.mxu0 %v276
    %328 = vmatprep.subr.bf16.mxu0 0
    %329 = vmatpush1.bf16.msra.mxu0 %v277
    %330 = vmatprep.subr.bf16.mxu0 0
    %331 = vmatpush1.bf16.msra.mxu0 %v278
    %332 = vmatprep.subr.bf16.mxu0 0
    %333 = vmatpush1.bf16.msra.mxu0 %v279
    %334 = vmatprep.subr.bf16.mxu0 0
    %335 = vmatpush1.bf16.msra.mxu0 %v280
    %336 = vmatprep.subr.bf16.mxu0 0
    %337 = vmatpush1.bf16.msra.mxu0 %v281
    %338 = vmatprep.subr.bf16.mxu0 0
    %339 = vmatpush1.bf16.msra.mxu0 %v282
    %340 = vmatprep.subr.bf16.mxu0 0
    %341 = vmatpush1.bf16.msra.mxu0 %v283
    %342 = vmatprep.subr.bf16.mxu0 0
    %343 = vmatpush1.bf16.msra.mxu0 %v284
    %344 = vmatprep.subr.bf16.mxu0 0
    %345 = vmatpush1.bf16.msra.mxu0 %v285
    %346 = vmatprep.subr.bf16.mxu0 0
    %347 = vmatpush1.bf16.msra.mxu0 %v286
    %348 = vmatprep.subr.bf16.mxu0 0
    %349 = vmatpush1.bf16.msra.mxu0 %v287
    %350 = vmatprep.subr.bf16.mxu0 0
    %351 = vmatpush1.bf16.msra.mxu0 %v288
    %352 = vmatprep.subr.bf16.mxu0 0
    %353 = vmatpush1.bf16.msra.mxu0 %v289
    %354 = vmatprep.mubr.bf16.mxu0 %v121
    %355 = vmatmul.mubr.bf16.gmra.mrb[0].mxu0 %v120
    %v356 = vpop.f32.mrb[0].mxu0
    %v357 = vadd.f32 %v176, %v356
    %v358 = vpop.f32.mrb[0].mxu0
    %v359 = vpop.f32.mrb[0].mxu0
    %v360 = vadd.f32 %v176, %v359
    %v361 = vpop.f32.mrb[0].mxu0
    %362 = vdwg.mxu0
    %363 = vmatprep.subr.bf16.mxu0 0
    %364 = vmatpush1.bf16.msra.mxu0 %v290
    %365 = vmatprep.subr.bf16.mxu0 0
    %366 = vmatpush1.bf16.msra.mxu0 %v291
    %367 = vmatprep.subr.bf16.mxu0 0
    %368 = vmatpush1.bf16.msra.mxu0 %v292
    %369 = vmatprep.subr.bf16.mxu0 0
    %370 = vmatpush1.bf16.msra.mxu0 %v293
    %371 = vmatprep.subr.bf16.mxu0 0
    %372 = vmatpush1.bf16.msra.mxu0 %v294
    %373 = vmatprep.subr.bf16.mxu0 0
    %374 = vmatpush1.bf16.msra.mxu0 %v295
    %375 = vmatprep.subr.bf16.mxu0 0
    %376 = vmatpush1.bf16.msra.mxu0 %v296
    %377 = vmatprep.subr.bf16.mxu0 0
    %378 = vmatpush1.bf16.msra.mxu0 %v297
    %379 = vmatprep.subr.bf16.mxu0 0
    %380 = vmatpush1.bf16.msra.mxu0 0
    %381 = vmatprep.subr.bf16.mxu0 0
    %382 = vmatpush1.bf16.msra.mxu0 0
    %383 = vmatprep.subr.bf16.mxu0 0
    %384 = vmatpush1.bf16.msra.mxu0 0
    %385 = vmatprep.subr.bf16.mxu0 0
    %386 = vmatpush1.bf16.msra.mxu0 0
    %387 = vmatprep.subr.bf16.mxu0 0
    %388 = vmatpush1.bf16.msra.mxu0 0
    %389 = vmatprep.subr.bf16.mxu0 0
    %390 = vmatpush1.bf16.msra.mxu0 0
    %391 = vmatprep.subr.bf16.mxu0 0
    %392 = vmatpush1.bf16.msra.mxu0 0
    %393 = vmatprep.subr.bf16.mxu0 0
    %394 = vmatpush1.bf16.msra.mxu0 0
    %395 = vmatprep.mubr.bf16.mxu0 0
    %396 = vmatmul.mubr.bf16.gmra.mrb[0].mxu0 %v122
    %v397 = vpop.f32.mrb[0].mxu0
    %v398 = vadd.f32 %v357, %v397
    %v399 = vpop.f32.mrb[0].mxu0
    %v400 = vpop.f32.mrb[0].mxu0
    %v401 = vadd.f32 %v360, %v400
    %v402 = vpop.f32.mrb[0].mxu0
    %403 = vdwg.mxu0
    %v404 = vmax.f32 %v398, 0.0
    %v405 = vmax.f32 %v401, 0.0
    %vm406 = vcmask 1040384
    %vm407 = vsmask.f32 256
    %vm408 = vmand %vm406, %vm407
    %v409 = vld [vmem:[#allocation3] sm:$0x1]
    %v410 = vsel %vm408, 0, %v409
    %411 = vst [vmem:[#allocation3] sm:$0x1] %v410
    %v412 = vld [vmem:[#allocation3 + $0x8] sm:$0x1]
    %v413 = vsel %vm408, 0, %v412
    %414 = vst [vmem:[#allocation3 + $0x8] sm:$0x1] %v413
    %vm415 = vsmask.f32 7938
    %vm416 = vmand %vm406, %vm415
    %v417 = vld [vmem:[#allocation3 + $0x4] sm:$0x1]
    %v418 = vsel %vm416, 0, %v417
    %419 = vst [vmem:[#allocation3 + $0x4] sm:$0x1] %v418
    %v420 = vld [vmem:[#allocation3 + $0xc] sm:$0x1]
    %v421 = vsel %vm416, 0, %v420
    %422 = vst [vmem:[#allocation3 + $0xc] sm:$0x1] %v421
    %v423 = vpack.c.bf16 %v404, %v404
    %v425 = vunpack.c.l.b16 %v423
    %v426 = vpack.c.b16 %v425, %v425
    %v428 = vshrl.u32 %v426, 16
    %v430 = vrot.slane %v428, 7
    %v431 = vshll.u32 %v426, 16
    %v433 = vor.u32 %v430, %v431
    %v434 = vrot.slane %v430, 4
    %vm437 = vcmask 1043456
    %vm438 = vmand %vm437, %vm415
    %v439 = vld [vmem:[#allocation3] sm:$0xf]
    %v440 = vsel %vm438, %v433, %v439
    %441 = vst [vmem:[#allocation3] sm:$0xf] %v440
    %v442 = vld [vmem:[#allocation3 + $0x4] sm:$0x1]
    %v443 = vsel %vm408, %v434, %v442
    %444 = vst [vmem:[#allocation3 + $0x4] sm:$0x1] %v443
    %v445 = vpack.c.bf16 %v405, %v405
    %v447 = vunpack.c.l.b16 %v445
    %v448 = vpack.c.b16 %v447, %v447
    %v450 = vshrl.u32 %v448, 16
    %v452 = vrot.slane %v450, 7
    %v453 = vshll.u32 %v448, 16
    %v455 = vor.u32 %v452, %v453
    %v456 = vrot.slane %v452, 4
    %s459 = scalar_lea.vmem [#allocation3], 8
    %v460 = vld [vmem:[%s459] sm:$0xf]
    %v461 = vsel %vm438, %v455, %v460
    %462 = vst [vmem:[%s459] sm:$0xf] %v461
    %v463 = vld [vmem:[%s459 + $0x4] sm:$0x1]
    %v464 = vsel %vm408, %v456, %v463
    %465 = vst [vmem:[%s459 + $0x4] sm:$0x1] %v464
    %v466 = vld [vmem:[#allocation3] sm:$0xf]
    %467 = vst [vmem:[#allocation4] sm:$0xf] %v466
    %v468 = vld [vmem:[#allocation3] sm:$0xf]
    %v469 = vld [vmem:[#allocation3 + $0x4] sm:$0x1]
    %v472 = vunpack.c.l.b16 %v468
    %v473 = vunpack.c.l.b16 %v469
    %v474 = vpack.c.b16 %v473, %v472
    %v476 = vshrl.u32 %v474, 16
    %v478 = vshll.u32 %v474, 16
    %v480 = vrot.slane %v478, 1
    %v481 = vor.u32 %v476, %v480
    %483 = vst [vmem:[#allocation4 + $0x8] sm:$0xf] %v481
    %v484 = vld [vmem:[#allocation3] sm:$0xe]
    %v485 = vld [vmem:[#allocation3 + $0x4] sm:$0x1]
    %v488 = vunpack.c.l.b16 %v484
    %v489 = vunpack.c.l.b16 %v485
    %v490 = vpack.c.b16 %v489, %v488
    %v491 = vrot.slane %v490, 1
    %493 = vst [vmem:[#allocation4 + $0x10] sm:$0xf] %v491
    %v494 = vld [vmem:[%s459] sm:$0xf]
    %v496 = vunpack.c.l.b16 %v494
    %v497 = vpack.c.b16 %v496, %v496
    %499 = vst [vmem:[#allocation4] sm:$0xf0] %v497
    %v500 = vld [vmem:[%s459] sm:$0xf]
    %v501 = vld [vmem:[%s459 + $0x4] sm:$0x1]
    %v504 = vunpack.c.l.b16 %v500
    %v505 = vunpack.c.l.b16 %v501
    %v506 = vpack.c.b16 %v505, %v504
    %v508 = vshrl.u32 %v506, 16
    %v510 = vrot.slane %v508, 4
    %v511 = vshll.u32 %v506, 16
    %v513 = vrot.slane %v511, 5
    %v514 = vor.u32 %v510, %v513
    %516 = vst [vmem:[#allocation4 + $0x8] sm:$0xf0] %v514
    %v517 = vld [vmem:[%s459] sm:$0xe]
    %v518 = vld [vmem:[%s459 + $0x4] sm:$0x1]
    %v521 = vunpack.c.l.b16 %v517
    %v522 = vunpack.c.l.b16 %v518
    %v523 = vpack.c.b16 %v522, %v521
    %v524 = vrot.slane %v523, 5
    %526 = vst [vmem:[#allocation4 + $0x10] sm:$0xf0] %v524
    %v527 = vld [vmem:[#allocation4] sm:$0xff]
    %v528 = vld [vmem:[#allocation4 + $0x8] sm:$0xff]
    %v529 = vld [vmem:[#allocation4 + $0x10] sm:$0xff]
    %v530 = vld [vmem:[#allocation9] sm:$0xf]
    %v531 = vld [vmem:[#allocation9 + $0x4] sm:$0xf]
    %v532 = vld [vmem:[#allocation9 + $0x8] sm:$0xf]
    %v533 = vld [vmem:[#allocation9 + $0xc] sm:$0xf]
    %v534 = vld [vmem:[#allocation9 + $0x10] sm:$0xf]
    %v535 = vld [vmem:[#allocation9 + $0x14] sm:$0xf]
    %v536 = vld [vmem:[#allocation9 + $0x18] sm:$0xf]
    %v537 = vld [vmem:[#allocation9 + $0x1c] sm:$0xf]
    %v538 = vld [vmem:[#allocation9 + $0x20] sm:$0xf]
    %v539 = vld [vmem:[#allocation9 + $0x24] sm:$0xf]
    %v540 = vld [vmem:[#allocation9 + $0x28] sm:$0xf]
    %v541 = vld [vmem:[#allocation9 + $0x2c] sm:$0xf]
    %v542 = vld [vmem:[#allocation9 + $0x30] sm:$0xf]
    %v543 = vld [vmem:[#allocation9 + $0x34] sm:$0xf]
    %v544 = vld [vmem:[#allocation9 + $0x38] sm:$0xf]
    %v545 = vld [vmem:[#allocation9 + $0x3c] sm:$0xf]
    %v546 = vld [vmem:[#allocation9 + $0x40] sm:$0xf]
    %v547 = vld [vmem:[#allocation9 + $0x44] sm:$0xf]
    %v548 = vld [vmem:[#allocation9 + $0x48] sm:$0xf]
    %v549 = vld [vmem:[#allocation9 + $0x4c] sm:$0xf]
    %v550 = vld [vmem:[#allocation9 + $0x50] sm:$0xf]
    %v551 = vld [vmem:[#allocation9 + $0x54] sm:$0xf]
    %v552 = vld [vmem:[#allocation9 + $0x58] sm:$0xf]
    %v553 = vld [vmem:[#allocation9 + $0x5c] sm:$0xf]
    %v554 = vld [vmem:[#allocation9 + $0x60] sm:$0xf]
    %v555 = vld [vmem:[#allocation9 + $0x64] sm:$0xf]
    %v556 = vld [vmem:[#allocation9 + $0x68] sm:$0xf]
    %v557 = vld [vmem:[#allocation9 + $0x6c] sm:$0xf]
    %v558 = vld [vmem:[#allocation9 + $0x70] sm:$0xf]
    %v559 = vld [vmem:[#allocation9 + $0x74] sm:$0xf]
    %v560 = vld [vmem:[#allocation9 + $0x78] sm:$0xf]
    %v561 = vld [vmem:[#allocation9 + $0x7c] sm:$0xf]
    %v562 = vld [vmem:[#allocation9 + $0x80] sm:$0xf]
    %v563 = vld [vmem:[#allocation9 + $0x84] sm:$0xf]
    %v564 = vld [vmem:[#allocation9 + $0x88] sm:$0xf]
    %v565 = vld [vmem:[#allocation9 + $0x8c] sm:$0xf]
    %v566 = vld [vmem:[#allocation9 + $0x90] sm:$0xf]
    %v567 = vld [vmem:[#allocation9 + $0x94] sm:$0xf]
    %v568 = vld [vmem:[#allocation9 + $0x98] sm:$0xf]
    %v569 = vld [vmem:[#allocation9 + $0x9c] sm:$0xf]
    %v570 = vld [vmem:[#allocation9 + $0xa0] sm:$0xf]
    %v571 = vld [vmem:[#allocation9 + $0xa4] sm:$0xf]
    %v572 = vld [vmem:[#allocation9 + $0xa8] sm:$0xf]
    %v573 = vld [vmem:[#allocation9 + $0xac] sm:$0xf]
    %v574 = vld [vmem:[#allocation9 + $0xb0] sm:$0xf]
    %v575 = vld [vmem:[#allocation9 + $0xb4] sm:$0xf]
    %v576 = vld [vmem:[#allocation9 + $0xb8] sm:$0xf]
    %v577 = vld [vmem:[#allocation9 + $0xbc] sm:$0xf]
    %v578 = vld [vmem:[%s4] sm:$0x1]
    %v580 = vlaneseq
    %v581 = vshrl.u32 %v580, 7
    %v582 = vsub.s32 0, %v581
    %v583 = vrot.slane %v578, %v582
    %v633 = vunpack.c.l.b16 %v530
    %v634 = vunpack.c.l.b16 %v531
    %v635 = vunpack.c.l.b16 %v532
    %v636 = vunpack.c.l.b16 %v533
    %v637 = vunpack.c.l.b16 %v534
    %v638 = vunpack.c.l.b16 %v535
    %v639 = vunpack.c.l.b16 %v536
    %v640 = vunpack.c.l.b16 %v537
    %v641 = vunpack.c.l.b16 %v538
    %v642 = vunpack.c.l.b16 %v539
    %v643 = vunpack.c.l.b16 %v540
    %v644 = vunpack.c.l.b16 %v541
    %v645 = vunpack.c.l.b16 %v542
    %v646 = vunpack.c.l.b16 %v543
    %v647 = vunpack.c.l.b16 %v544
    %v648 = vunpack.c.l.b16 %v545
    %v649 = vunpack.c.l.b16 %v546
    %v650 = vunpack.c.l.b16 %v547
    %v651 = vunpack.c.l.b16 %v548
    %v652 = vunpack.c.l.b16 %v549
    %v653 = vunpack.c.l.b16 %v550
    %v654 = vunpack.c.l.b16 %v551
    %v655 = vunpack.c.l.b16 %v552
    %v656 = vunpack.c.l.b16 %v553
    %v657 = vunpack.c.l.b16 %v554
    %v658 = vunpack.c.l.b16 %v555
    %v659 = vunpack.c.l.b16 %v556
    %v660 = vunpack.c.l.b16 %v557
    %v661 = vunpack.c.l.b16 %v558
    %v662 = vunpack.c.l.b16 %v559
    %v663 = vunpack.c.l.b16 %v560
    %v664 = vunpack.c.l.b16 %v561
    %v665 = vunpack.c.l.b16 %v562
    %v666 = vunpack.c.l.b16 %v563
    %v667 = vunpack.c.l.b16 %v564
    %v668 = vunpack.c.l.b16 %v565
    %v669 = vunpack.c.l.b16 %v566
    %v670 = vunpack.c.l.b16 %v567
    %v671 = vunpack.c.l.b16 %v568
    %v672 = vunpack.c.l.b16 %v569
    %v673 = vunpack.c.l.b16 %v570
    %v674 = vunpack.c.l.b16 %v571
    %v675 = vunpack.c.l.b16 %v572
    %v676 = vunpack.c.l.b16 %v573
    %v677 = vunpack.c.l.b16 %v574
    %v678 = vunpack.c.l.b16 %v575
    %v679 = vunpack.c.l.b16 %v576
    %v680 = vunpack.c.l.b16 %v577
    %v681 = vpack.c.b16 %v634, %v633
    %v682 = vpack.c.b16 %v636, %v635
    %v683 = vpack.c.b16 %v638, %v637
    %v684 = vpack.c.b16 %v640, %v639
    %v685 = vpack.c.b16 %v642, %v641
    %v686 = vpack.c.b16 %v644, %v643
    %v687 = vpack.c.b16 %v646, %v645
    %v688 = vpack.c.b16 %v648, %v647
    %v689 = vpack.c.b16 %v650, %v649
    %v690 = vpack.c.b16 %v652, %v651
    %v691 = vpack.c.b16 %v654, %v653
    %v692 = vpack.c.b16 %v656, %v655
    %v693 = vpack.c.b16 %v658, %v657
    %v694 = vpack.c.b16 %v660, %v659
    %v695 = vpack.c.b16 %v662, %v661
    %v696 = vpack.c.b16 %v664, %v663
    %v697 = vpack.c.b16 %v666, %v665
    %v698 = vpack.c.b16 %v668, %v667
    %v699 = vpack.c.b16 %v670, %v669
    %v700 = vpack.c.b16 %v672, %v671
    %v701 = vpack.c.b16 %v674, %v673
    %v702 = vpack.c.b16 %v676, %v675
    %v703 = vpack.c.b16 %v678, %v677
    %v704 = vpack.c.b16 %v680, %v679
    %729 = vmatprep.subr.bf16.mxu0 0
    %730 = vmatpush1.bf16.msra.mxu0 %v681
    %731 = vmatprep.subr.bf16.mxu0 0
    %732 = vmatpush1.bf16.msra.mxu0 %v682
    %733 = vmatprep.subr.bf16.mxu0 0
    %734 = vmatpush1.bf16.msra.mxu0 %v683
    %735 = vmatprep.subr.bf16.mxu0 0
    %736 = vmatpush1.bf16.msra.mxu0 %v684
    %737 = vmatprep.subr.bf16.mxu0 0
    %738 = vmatpush1.bf16.msra.mxu0 %v685
    %739 = vmatprep.subr.bf16.mxu0 0
    %740 = vmatpush1.bf16.msra.mxu0 %v686
    %741 = vmatprep.subr.bf16.mxu0 0
    %742 = vmatpush1.bf16.msra.mxu0 %v687
    %743 = vmatprep.subr.bf16.mxu0 0
    %744 = vmatpush1.bf16.msra.mxu0 %v688
    %745 = vmatprep.subr.bf16.mxu0 0
    %746 = vmatpush1.bf16.msra.mxu0 %v689
    %747 = vmatprep.subr.bf16.mxu0 0
    %748 = vmatpush1.bf16.msra.mxu0 %v690
    %749 = vmatprep.subr.bf16.mxu0 0
    %750 = vmatpush1.bf16.msra.mxu0 %v691
    %751 = vmatprep.subr.bf16.mxu0 0
    %752 = vmatpush1.bf16.msra.mxu0 %v692
    %753 = vmatprep.subr.bf16.mxu0 0
    %754 = vmatpush1.bf16.msra.mxu0 %v693
    %755 = vmatprep.subr.bf16.mxu0 0
    %756 = vmatpush1.bf16.msra.mxu0 %v694
    %757 = vmatprep.subr.bf16.mxu0 0
    %758 = vmatpush1.bf16.msra.mxu0 %v695
    %759 = vmatprep.subr.bf16.mxu0 0
    %760 = vmatpush1.bf16.msra.mxu0 %v696
    %761 = vmatprep.mubr.bf16.mxu0 %v528
    %762 = vmatmul.mubr.bf16.gmra.mrb[0].mxu0 %v527
    %v763 = vpop.f32.mrb[0].mxu0
    %v764 = vadd.f32 %v583, %v763
    %v765 = vpop.f32.mrb[0].mxu0
    %v766 = vpop.f32.mrb[0].mxu0
    %v767 = vadd.f32 %v583, %v766
    %v768 = vpop.f32.mrb[0].mxu0
    %769 = vdwg.mxu0
    %770 = vmatprep.subr.bf16.mxu0 0
    %771 = vmatpush1.bf16.msra.mxu0 %v697
    %772 = vmatprep.subr.bf16.mxu0 0
    %773 = vmatpush1.bf16.msra.mxu0 %v698
    %774 = vmatprep.subr.bf16.mxu0 0
    %775 = vmatpush1.bf16.msra.mxu0 %v699
    %776 = vmatprep.subr.bf16.mxu0 0
    %777 = vmatpush1.bf16.msra.mxu0 %v700
    %778 = vmatprep.subr.bf16.mxu0 0
    %779 = vmatpush1.bf16.msra.mxu0 %v701
    %780 = vmatprep.subr.bf16.mxu0 0
    %781 = vmatpush1.bf16.msra.mxu0 %v702
    %782 = vmatprep.subr.bf16.mxu0 0
    %783 = vmatpush1.bf16.msra.mxu0 %v703
    %784 = vmatprep.subr.bf16.mxu0 0
    %785 = vmatpush1.bf16.msra.mxu0 %v704
    %786 = vmatprep.subr.bf16.mxu0 0
    %787 = vmatpush1.bf16.msra.mxu0 0
    %788 = vmatprep.subr.bf16.mxu0 0
    %789 = vmatpush1.bf16.msra.mxu0 0
    %790 = vmatprep.subr.bf16.mxu0 0
    %791 = vmatpush1.bf16.msra.mxu0 0
    %792 = vmatprep.subr.bf16.mxu0 0
    %793 = vmatpush1.bf16.msra.mxu0 0
    %794 = vmatprep.subr.bf16.mxu0 0
    %795 = vmatpush1.bf16.msra.mxu0 0
    %796 = vmatprep.subr.bf16.mxu0 0
    %797 = vmatpush1.bf16.msra.mxu0 0
    %798 = vmatprep.subr.bf16.mxu0 0
    %799 = vmatpush1.bf16.msra.mxu0 0
    %800 = vmatprep.subr.bf16.mxu0 0
    %801 = vmatpush1.bf16.msra.mxu0 0
    %802 = vmatprep.mubr.bf16.mxu0 0
    %803 = vmatmul.mubr.bf16.gmra.mrb[0].mxu0 %v529
    %v804 = vpop.f32.mrb[0].mxu0
    %v805 = vadd.f32 %v764, %v804
    %v806 = vpop.f32.mrb[0].mxu0
    %v807 = vpop.f32.mrb[0].mxu0
    %v808 = vadd.f32 %v767, %v807
    %v809 = vpop.f32.mrb[0].mxu0
    %810 = vdwg.mxu0
    %v811 = vmax.f32 %v805, 0.0
    %v812 = vmax.f32 %v808, 0.0
    %v813 = vld [vmem:[%s5] sm:$0x1]
    %v814 = vpack.c.bf16 %v812, %v811
    %v815 = vld [vmem:[#allocation5] sm:$0x1]
    %817 = vset.pattern.permute.xlu0 0
    %818 = vperm.xlu0 %817, %v815
    %v819 = vpop.permute.xlu0 %818
    %v821 = vlaneseq
    %v822 = vshrl.u32 %v821, 7
    %v823 = vsub.s32 0, %v822
    %v824 = vrot.slane %v819, %v823
    %825 = vmatprep.subr.bf16.mxu0 0
    %826 = vmatpush1.bf16.xpose.msra.mxu0 %v814
    %827 = vmatprep.subr.bf16.mxu0 0
    %828 = vmatpush1.bf16.xpose.msra.mxu0 0
    %829 = vmatprep.subr.bf16.mxu0 0
    %830 = vmatpush1.bf16.xpose.msra.mxu0 0
    %831 = vmatprep.subr.bf16.mxu0 0
    %832 = vmatpush1.bf16.xpose.msra.mxu0 0
    %833 = vmatprep.subr.bf16.mxu0 0
    %834 = vmatpush1.bf16.xpose.msra.mxu0 0
    %835 = vmatprep.subr.bf16.mxu0 0
    %836 = vmatpush1.bf16.xpose.msra.mxu0 0
    %837 = vmatprep.subr.bf16.mxu0 0
    %838 = vmatpush1.bf16.xpose.msra.mxu0 0
    %839 = vmatprep.subr.bf16.mxu0 0
    %840 = vmatpush1.bf16.xpose.msra.mxu0 0
    %841 = vmatprep.subr.bf16.mxu0 0
    %842 = vmatpush1.bf16.xpose.msra.mxu0 0
    %843 = vmatprep.subr.bf16.mxu0 0
    %844 = vmatpush1.bf16.xpose.msra.mxu0 0
    %845 = vmatprep.subr.bf16.mxu0 0
    %846 = vmatpush1.bf16.xpose.msra.mxu0 0
    %847 = vmatprep.subr.bf16.mxu0 0
    %848 = vmatpush1.bf16.xpose.msra.mxu0 0
    %849 = vmatprep.subr.bf16.mxu0 0
    %850 = vmatpush1.bf16.xpose.msra.mxu0 0
    %851 = vmatprep.subr.bf16.mxu0 0
    %852 = vmatpush1.bf16.xpose.msra.mxu0 0
    %853 = vmatprep.subr.bf16.mxu0 0
    %854 = vmatpush1.bf16.xpose.msra.mxu0 0
    %855 = vmatprep.subr.bf16.mxu0 0
    %856 = vmatpush1.bf16.xpose.msra.mxu0 0
    %857 = vmatprep.mubr.bf16.mxu0 0
    %858 = vmatmul.mubr.bf16.gmra.mrb[0].mxu0 %v813
    %v859 = vpop.f32.mrb[0].mxu0
    %v860 = vadd.f32 %v824, %v859
    %v861 = vpop.f32.mrb[0].mxu0
    %v862 = vpop.f32.mrb[0].mxu0
    %v863 = vpop.f32.mrb[0].mxu0
    %864 = vdwg.mxu0
    %vm865 = vcmask 122880
    %866 = vst.msk [vmem:[#allocation11] sm:$0x1] %vm865, %v860
    // Predicated region
    $region38: #{tpu_custom_call.1} parent=1 // pred_check
      _
    $region39: #{tpu_custom_call.1} parent=1 // pred_check_branch
      %868 = sbr.rel (0) target = $region41
    $region40: #{tpu_custom_call.1} parent=1 // pred_region
      %s870 = ssub.s32 16, 16
      %871 = vsyncadd [#allocation8], %s870
      %s873 = sshll.u32 [#allocation11], 4
      %s874 = int_to_ptr.vmem [resolvable:$true] %s873
      %876 = dma.vmem_to_hbm [thread:$0]  %s874, 16, %s7, [#allocation8]
    $region41: #{tpu_custom_call.1} parent=1 // pred_fallthru
      _
    // Predicated region
    $region42: #{tpu_custom_call.1} parent=1 // pred_check
      _
    $region43: #{tpu_custom_call.1} parent=1 // pred_check_branch
      %878 = sbr.rel (0) target = $region45
    $region44: #{tpu_custom_call.1} parent=1 // pred_region
      %879 = dma.done [#allocation8], 16
    $region45: #{tpu_custom_call.1} parent=1 // pred_fallthru
      _
    %880 = vsyncpa [#allocation7], 1
    %881 = vsyncpa [#allocation10], 1
    %882 = vsyncpa [#allocation8], 1

</llo_original>
